<compile_context>
chip_gen: v5e
topology: v5e:2x2
jax: 0.10.0
libtpu: 0.0.40
codegen_flags: <defaults>
</compile_context>

<pallas_src>
import math
from functools import partial

import jax
import jax.numpy as jnp
from jax.experimental import pallas as pl
from jax.experimental.pallas import tpu as pltpu

LANE = 128


def _round_up(x, m):
    return (x + m - 1) // m * m


def dqn_kernel(x_ref, w1_ref, b1_ref, w2_ref, b2_ref, w3_ref, b3_ref, o_ref):
    # Cast the activation tile to bf16 in-kernel (VPU work, hidden under the
    # inbound DMA) so the wrapper never materializes a second copy of x in HBM.
    x = x_ref[...].astype(w1_ref.dtype)
    # fc1 + relu : bf16 MXU matmul, f32 accumulation / elementwise
    h1 = jnp.dot(x, w1_ref[...], preferred_element_type=jnp.float32)
    h1 = jnp.maximum(h1 + b1_ref[...], 0.0)
    # fc2 + relu
    h2 = jnp.dot(h1.astype(w2_ref.dtype), w2_ref[...],
                 preferred_element_type=jnp.float32)
    h2 = jnp.maximum(h2 + b2_ref[...], 0.0)
    # out (no activation); store lane-dense bf16 (halves output writeback bytes,
    # only 2 of the 128 lanes are real Q-values).
    o = jnp.dot(h2.astype(w3_ref.dtype), w3_ref[...],
                preferred_element_type=jnp.float32)
    o_ref[...] = (o + b3_ref[...]).astype(o_ref.dtype)


def prepare_params(params, in_features, compute_dtype=jnp.bfloat16):
    """One-time prep: transpose to (in, out), zero-pad features to 128 lanes, cast.

    Returns ((w1t, b1), (w2t, b2), (w3t, b3)) with weights in `compute_dtype`
    and biases kept in f32 (bias add / relu stay f32 in-kernel).  Padded
    weight/bias entries are exactly zero so the math is unchanged.
    """
    prepped = []
    prev_in_pad = _round_up(in_features, LANE)
    for (w, b) in params:
        out_f, in_f = w.shape
        out_pad = _round_up(out_f, LANE)
        wt = jnp.zeros((prev_in_pad, out_pad), compute_dtype)
        wt = wt.at[:in_f, :out_f].set(w.T.astype(compute_dtype))
        br = jnp.zeros((1, out_pad), jnp.float32)
        br = br.at[0, :out_f].set(b.astype(jnp.float32))
        prepped.append((wt, br))
        prev_in_pad = out_pad
    return tuple(prepped)


@partial(jax.jit, static_argnames=("out_features", "tile_b"))
def dqn_forward(x_nchw, prepped_params, *, out_features=2, tile_b=1024):
    """x_nchw: (B, 3, H, W) float32 (or bfloat16). Returns (B, out_features) f32."""
    (w1, b1), (w2, b2), (w3, b3) = prepped_params

    B = x_nchw.shape[0]
    x_flat = x_nchw.reshape(B, -1)          # == torch .flatten(start_dim=1); layout-free
    f_in = x_flat.shape[1]
    f_pad = w1.shape[0]                     # 128-aligned input features
    n_pad = w3.shape[1]                     # 128-aligned output features

    if f_pad != f_in:
        # Rare path (in_features not 128-aligned); for H=W=16, 3 channels it's 768.
        x_flat = jnp.pad(x_flat, ((0, 0), (0, f_pad - f_in)))

    # Batch tiling: NO batch padding -- the last grid block may be partial
    # (Pallas masks OOB output writes; garbage OOB input rows only feed output
    # rows that are never written).  tile_b is kept a multiple of 16 so full
    # blocks always satisfy the (8,128)/(16,128) layout rule.
    tile_b = max(16, _round_up(tile_b, 16))
    tb = min(tile_b, B)
    if tb == B and B >= 32:
        # Keep grid >= 2 steps so v7x's two TensorCores both get work.
        tb = min(B, _round_up((B + 1) // 2, 16))
    grid = (pl.cdiv(B, tb),)

    out_bf16 = pl.pallas_call(
        dqn_kernel,
        out_shape=jax.ShapeDtypeStruct((B, n_pad), jnp.bfloat16),
        grid=grid,
        in_specs=[
            pl.BlockSpec((tb, f_pad), lambda i: (i, 0)),                  # x tile (pipelined)
            pl.BlockSpec((f_pad, w1.shape[1]), lambda i: (0, 0)),         # w1^T (VMEM-resident)
            pl.BlockSpec((1, b1.shape[1]), lambda i: (0, 0)),             # b1
            pl.BlockSpec((w2.shape[0], w2.shape[1]), lambda i: (0, 0)),   # w2^T
            pl.BlockSpec((1, b2.shape[1]), lambda i: (0, 0)),             # b2
            pl.BlockSpec((w3.shape[0], w3.shape[1]), lambda i: (0, 0)),   # w3^T
            pl.BlockSpec((1, b3.shape[1]), lambda i: (0, 0)),             # b3
        ],
        out_specs=pl.BlockSpec((tb, n_pad), lambda i: (i, 0)),
        compiler_params=pltpu.CompilerParams(
            dimension_semantics=("parallel",)),
    )(x_flat, w1, b1, w2, b2, w3, b3)

    return out_bf16[:, :out_features].astype(jnp.float32)


def init_linear(key, out_features, in_features):
    """Deterministic init mimicking torch.nn.Linear default (Kaiming-uniform-ish)."""
    kw, kb = jax.random.split(key)
    bound = 1.0 / math.sqrt(in_features)
    w = jax.random.uniform(kw, (out_features, in_features), jnp.float32, -bound, bound)
    b = jax.random.uniform(kb, (out_features,), jnp.float32, -bound, bound)
    return w, b


def _ref_forward(xf, params, cd=None):
    """Pure-JAX reference.  cd=None -> full f32; cd=bf16 -> same quantization as kernel."""
    (w1, b1), (w2, b2), (w3, b3) = params
    if cd is None:
        h1 = jnp.maximum(xf @ w1.T + b1, 0.0)
        h2 = jnp.maximum(h1 @ w2.T + b2, 0.0)
        return h2 @ w3.T + b3
    h1 = jnp.maximum(jnp.dot(xf.astype(cd), w1.T.astype(cd),
                             preferred_element_type=jnp.float32) + b1, 0.0)
    h2 = jnp.maximum(jnp.dot(h1.astype(cd), w2.T.astype(cd),
                             preferred_element_type=jnp.float32) + b2, 0.0)
    return jnp.dot(h2.astype(cd), w3.T.astype(cd),
                   preferred_element_type=jnp.float32) + b3


if __name__ == "__main__":
    # Small shapes consistent with the module: img_height = img_width = 16, 3 channels.
    B, C, H, W = 2, 3, 16, 16
    in_features = C * H * W  # 768

    key = jax.random.PRNGKey(0)
    kx, kx2, k1, k2, k3 = jax.random.split(key, 5)

    x = jax.random.normal(kx, (B, C, H, W), jnp.float32)

    params = (
        init_linear(k1, 24, in_features),  # fc1
        init_linear(k2, 32, 24),           # fc2
        init_linear(k3, 2, 32),            # out
    )
    prepped = prepare_params(params, in_features, compute_dtype=jnp.bfloat16)

    out = jax.block_until_ready(dqn_forward(x, prepped))
    assert out.shape == (B, 2)

    xf = x.reshape(B, -1)
    # Reference 1: same bf16-input / f32-accumulate quantization as the kernel
    # (kernel additionally quantizes the output to bf16 -> 1e-2 tolerance).
    ref_bf16 = _ref_forward(xf, params, cd=jnp.bfloat16)
    assert jnp.allclose(out, ref_bf16, atol=1e-2, rtol=1e-2)
    # Reference 2: full-f32 torch-equivalent math (looser tolerance for bf16 path).
    ref_f32 = _ref_forward(xf, params)
    assert jnp.allclose(out, ref_f32, atol=1e-1, rtol=1e-1)

    # Exercise the multi-tile + partial-last-block path (grid > 1, last block ragged).
    B2 = 37
    x2 = jax.random.normal(kx2, (B2, C, H, W), jnp.float32)
    out2 = jax.block_until_ready(dqn_forward(x2, prepped, tile_b=16))
    assert out2.shape == (B2, 2)
    ref2 = _ref_forward(x2.reshape(B2, -1), params, cd=jnp.bfloat16)
    assert jnp.allclose(out2, ref2, atol=1e-2, rtol=1e-2)

    print("KERNEL_OK")
</pallas_src>

<mosaic_0001>
module attributes {stable_mosaic.version = 11 : i64} {
  func.func @dqn_kernel(%arg0: i32, %arg1: memref<2x768xf32, #tpu.memory_space<vmem>>, %arg2: memref<768x128xbf16, #tpu.memory_space<vmem>>, %arg3: memref<1x128xf32, #tpu.memory_space<vmem>>, %arg4: memref<128x128xbf16, #tpu.memory_space<vmem>>, %arg5: memref<1x128xf32, #tpu.memory_space<vmem>>, %arg6: memref<128x128xbf16, #tpu.memory_space<vmem>>, %arg7: memref<1x128xf32, #tpu.memory_space<vmem>>, %arg8: memref<2x128xbf16, #tpu.memory_space<vmem>>) attributes {dimension_semantics = [#tpu.dimension_semantics<parallel>], iteration_bounds = array<i64: 1>, scalar_prefetch = 0 : i64, scratch_operands = 0 : i64, tpu.core_type = #tpu.core_type<tc>, window_params = [{transform_indices = @transform_0, window_bounds = array<i64: 2, 768>}, {pipeline_mode = #tpu.pipeline_mode<synchronous>, transform_indices = @transform_1, window_bounds = array<i64: 768, 128>}, {pipeline_mode = #tpu.pipeline_mode<synchronous>, transform_indices = @transform_2, window_bounds = array<i64: 1, 128>}, {pipeline_mode = #tpu.pipeline_mode<synchronous>, transform_indices = @transform_3, window_bounds = array<i64: 128, 128>}, {pipeline_mode = #tpu.pipeline_mode<synchronous>, transform_indices = @transform_4, window_bounds = array<i64: 1, 128>}, {pipeline_mode = #tpu.pipeline_mode<synchronous>, transform_indices = @transform_5, window_bounds = array<i64: 128, 128>}, {pipeline_mode = #tpu.pipeline_mode<synchronous>, transform_indices = @transform_6, window_bounds = array<i64: 1, 128>}, {transform_indices = @transform_7, window_bounds = array<i64: 2, 128>}]} {
    %c0 = arith.constant 0 : index
    %c0_0 = arith.constant 0 : index
    %0 = vector.load %arg1[%c0, %c0_0] : memref<2x768xf32, #tpu.memory_space<vmem>>, vector<2x768xf32>
    %1 = arith.truncf %0 : vector<2x768xf32> to vector<2x768xbf16>
    %c0_1 = arith.constant 0 : index
    %c0_2 = arith.constant 0 : index
    %2 = vector.load %arg2[%c0_1, %c0_2] : memref<768x128xbf16, #tpu.memory_space<vmem>>, vector<768x128xbf16>
    %cst = arith.constant dense<0.000000e+00> : vector<2x128xf32>
    %3 = tpu.matmul %1, %2, %cst {dimension_numbers = #tpu.dot_dimension_numbers<[1], [0], [0], [1], [0, 0, 1, 1], [], []>} : vector<2x768xbf16>, vector<768x128xbf16>, vector<2x128xf32> -> vector<2x128xf32>
    %c0_3 = arith.constant 0 : index
    %c0_4 = arith.constant 0 : index
    %4 = vector.load %arg3[%c0_3, %c0_4] : memref<1x128xf32, #tpu.memory_space<vmem>>, vector<1x128xf32>
    %5 = vector.broadcast %4 : vector<1x128xf32> to vector<2x128xf32>
    %6 = arith.addf %3, %5 : vector<2x128xf32>
    %cst_5 = arith.constant 0.000000e+00 : f32
    %7 = vector.broadcast %cst_5 : f32 to vector<2x128xf32>
    %8 = arith.maximumf %6, %7 : vector<2x128xf32>
    %9 = arith.truncf %8 : vector<2x128xf32> to vector<2x128xbf16>
    %c0_6 = arith.constant 0 : index
    %c0_7 = arith.constant 0 : index
    %10 = vector.load %arg4[%c0_6, %c0_7] : memref<128x128xbf16, #tpu.memory_space<vmem>>, vector<128x128xbf16>
    %cst_8 = arith.constant dense<0.000000e+00> : vector<2x128xf32>
    %11 = tpu.matmul %9, %10, %cst_8 {dimension_numbers = #tpu.dot_dimension_numbers<[1], [0], [0], [1], [0, 0, 1, 1], [], []>} : vector<2x128xbf16>, vector<128x128xbf16>, vector<2x128xf32> -> vector<2x128xf32>
    %c0_9 = arith.constant 0 : index
    %c0_10 = arith.constant 0 : index
    %12 = vector.load %arg5[%c0_9, %c0_10] : memref<1x128xf32, #tpu.memory_space<vmem>>, vector<1x128xf32>
    %13 = vector.broadcast %12 : vector<1x128xf32> to vector<2x128xf32>
    %14 = arith.addf %11, %13 : vector<2x128xf32>
    %cst_11 = arith.constant 0.000000e+00 : f32
    %15 = vector.broadcast %cst_11 : f32 to vector<2x128xf32>
    %16 = arith.maximumf %14, %15 : vector<2x128xf32>
    %17 = arith.truncf %16 : vector<2x128xf32> to vector<2x128xbf16>
    %c0_12 = arith.constant 0 : index
    %c0_13 = arith.constant 0 : index
    %18 = vector.load %arg6[%c0_12, %c0_13] : memref<128x128xbf16, #tpu.memory_space<vmem>>, vector<128x128xbf16>
    %cst_14 = arith.constant dense<0.000000e+00> : vector<2x128xf32>
    %19 = tpu.matmul %17, %18, %cst_14 {dimension_numbers = #tpu.dot_dimension_numbers<[1], [0], [0], [1], [0, 0, 1, 1], [], []>} : vector<2x128xbf16>, vector<128x128xbf16>, vector<2x128xf32> -> vector<2x128xf32>
    %c0_15 = arith.constant 0 : index
    %c0_16 = arith.constant 0 : index
    %20 = vector.load %arg7[%c0_15, %c0_16] : memref<1x128xf32, #tpu.memory_space<vmem>>, vector<1x128xf32>
    %21 = vector.broadcast %20 : vector<1x128xf32> to vector<2x128xf32>
    %22 = arith.addf %19, %21 : vector<2x128xf32>
    %23 = arith.truncf %22 : vector<2x128xf32> to vector<2x128xbf16>
    %c0_17 = arith.constant 0 : index
    %c0_18 = arith.constant 0 : index
    %24 = vector.load %arg8[%c0_17, %c0_18] : memref<2x128xbf16, #tpu.memory_space<vmem>>, vector<2x128xbf16>
    tpu.vector_store %arg8[%c0_17, %c0_18], %23 {strides = array<i32>} : memref<2x128xbf16, #tpu.memory_space<vmem>>, vector<2x128xbf16>,
    return
  }
  func.func @transform_0(%arg0: i32) -> (i32, i32) {
    %c0_i32 = arith.constant 0 : i32
    %c0_i32_0 = arith.constant 0 : i32
    return %arg0, %c0_i32 : i32, i32
  }
  func.func @transform_1(%arg0: i32) -> (i32, i32) {
    %c0_i32 = arith.constant 0 : i32
    %c0_i32_0 = arith.constant 0 : i32
    %c0_i32_1 = arith.constant 0 : i32
    return %c0_i32, %c0_i32_0 : i32, i32
  }
  func.func @transform_2(%arg0: i32) -> (i32, i32) {
    %c0_i32 = arith.constant 0 : i32
    %c0_i32_0 = arith.constant 0 : i32
    %c0_i32_1 = arith.constant 0 : i32
    return %c0_i32, %c0_i32_0 : i32, i32
  }
  func.func @transform_3(%arg0: i32) -> (i32, i32) {
    %c0_i32 = arith.constant 0 : i32
    %c0_i32_0 = arith.constant 0 : i32
    %c0_i32_1 = arith.constant 0 : i32
    return %c0_i32, %c0_i32_0 : i32, i32
  }
  func.func @transform_4(%arg0: i32) -> (i32, i32) {
    %c0_i32 = arith.constant 0 : i32
    %c0_i32_0 = arith.constant 0 : i32
    %c0_i32_1 = arith.constant 0 : i32
    return %c0_i32, %c0_i32_0 : i32, i32
  }
  func.func @transform_5(%arg0: i32) -> (i32, i32) {
    %c0_i32 = arith.constant 0 : i32
    %c0_i32_0 = arith.constant 0 : i32
    %c0_i32_1 = arith.constant 0 : i32
    return %c0_i32, %c0_i32_0 : i32, i32
  }
  func.func @transform_6(%arg0: i32) -> (i32, i32) {
    %c0_i32 = arith.constant 0 : i32
    %c0_i32_0 = arith.constant 0 : i32
    %c0_i32_1 = arith.constant 0 : i32
    return %c0_i32, %c0_i32_0 : i32, i32
  }
  func.func @transform_7(%arg0: i32) -> (i32, i32) {
    %c0_i32 = arith.constant 0 : i32
    %c0_i32_0 = arith.constant 0 : i32
    return %arg0, %c0_i32 : i32, i32
  }
}

</mosaic_0001>

<llo_original>
// kernel: dqn_forward.1
$region0: #{dqn_forward.1}
  #allocation0 [shape = 'u32[]', space=smem, size = 0x4, offset = 0x4, fixed_abs, tag = 'smem constant byte address 0x4 - core index']
  #allocation1 [shape = 'u32[72,128]{1,0:T(1,128)}', space=vmem, size = 0x9000, scoped, tag = 'internal scratch']
  %s0 = inlined_call_operand.vmem [shape: f32[2,768], index: 0, kind: input, shape index: {}]
  %s1 = inlined_call_operand.hbm [shape: bf16[768,128], index: 1, kind: input, shape index: {}]
  %s2 = inlined_call_operand.vmem [shape: f32[1,128], index: 2, kind: input, shape index: {}]
  %s3 = inlined_call_operand.vmem [shape: bf16[128,128], index: 3, kind: input, shape index: {}]
  %s4 = inlined_call_operand.vmem [shape: f32[1,128], index: 4, kind: input, shape index: {}]
  %s5 = inlined_call_operand.hbm [shape: bf16[128,128], index: 5, kind: input, shape index: {}]
  %s6 = inlined_call_operand.vmem [shape: f32[1,128], index: 6, kind: input, shape index: {}]
  %s7 = inlined_call_operand.vmem [shape: bf16[2,128], index: 7, kind: output, shape index: {}]
  %s8 = sld [smem:[#allocation0]]
  $region46: #{dqn_forward.1} parent=0
    _
  %s10 = ssub.s32 1, %s8
  %s11 = scalar_select 0, %s10, %s8
  $region1: #{dqn_forward.1} parent=0
    #allocation2 [shape = 'u8[196608]{0}', space=vmem, size = 0x30000, scoped, tag = 'input window, operand 1, single buffered']
    #allocation3 [shape = 's32[1]{0}', space=sflag, size = 0x4, scoped, tag = 'scoped memory for dqn_forward.1']
    #allocation4 [shape = 'u8[32768]{0}', space=vmem, size = 0x8000, scoped, tag = 'input window, operand 5, single buffered']
    #allocation5 [shape = 's32[1]{0}', space=sflag, size = 0x4, scoped, tag = 'scoped memory for dqn_forward.1']
    %12 = vsyncpa [#allocation3], 0
    %13 = vsyncpa [#allocation5], 0
    // Predicated region
    $region2: #{dqn_forward.1} parent=1 // pred_check
      _
    $region3: #{dqn_forward.1} parent=1 // pred_check_branch
      %15 = sbr.rel (0) target = $region5
    $region4: #{dqn_forward.1} parent=1 // pred_region
      _
    $region5: #{dqn_forward.1} parent=1 // pred_fallthru
      _
    // Predicated region
    $region6: #{dqn_forward.1} parent=1 // pred_check
      _
    $region7: #{dqn_forward.1} parent=1 // pred_check_branch
      %17 = sbr.rel (0) target = $region9
    $region8: #{dqn_forward.1} parent=1 // pred_region
      %19 = vsyncadd [#allocation3], 0
      %s20 = sshll.u32 %s1, 4
      %s21 = int_to_ptr.hbm [resolvable:$true] %s20
      %s22 = sshll.u32 [#allocation2], 4
      %s23 = int_to_ptr.vmem [resolvable:$true] %s22
      %28 = dma.hbm_to_vmem [thread:$0]  %s21, 6144, %s23, [#allocation3], 64, 64, 4
    $region9: #{dqn_forward.1} parent=1 // pred_fallthru
      _
    // Predicated region
    $region10: #{dqn_forward.1} parent=1 // pred_check
      _
    $region11: #{dqn_forward.1} parent=1 // pred_check_branch
      %30 = sbr.rel (0) target = $region13
    $region12: #{dqn_forward.1} parent=1 // pred_region
      _
    $region13: #{dqn_forward.1} parent=1 // pred_fallthru
      _
    // Predicated region
    $region14: #{dqn_forward.1} parent=1 // pred_check
      _
    $region15: #{dqn_forward.1} parent=1 // pred_check_branch
      %32 = sbr.rel (0) target = $region17
    $region16: #{dqn_forward.1} parent=1 // pred_region
      _
    $region17: #{dqn_forward.1} parent=1 // pred_fallthru
      _
    // Predicated region
    $region18: #{dqn_forward.1} parent=1 // pred_check
      _
    $region19: #{dqn_forward.1} parent=1 // pred_check_branch
      %34 = sbr.rel (0) target = $region21
    $region20: #{dqn_forward.1} parent=1 // pred_region
      _
    $region21: #{dqn_forward.1} parent=1 // pred_fallthru
      _
    // Predicated region
    $region22: #{dqn_forward.1} parent=1 // pred_check
      _
    $region23: #{dqn_forward.1} parent=1 // pred_check_branch
      %36 = sbr.rel (0) target = $region25
    $region24: #{dqn_forward.1} parent=1 // pred_region
      %38 = vsyncadd [#allocation5], 0
      %s39 = sshll.u32 %s5, 4
      %s40 = int_to_ptr.hbm [resolvable:$true] %s39
      %s41 = sshll.u32 [#allocation4], 4
      %s42 = int_to_ptr.vmem [resolvable:$true] %s41
      %47 = dma.hbm_to_vmem [thread:$0]  %s40, 1024, %s42, [#allocation5], 64, 64, 4
    $region25: #{dqn_forward.1} parent=1 // pred_fallthru
      _
    // Predicated region
    $region26: #{dqn_forward.1} parent=1 // pred_check
      _
    $region27: #{dqn_forward.1} parent=1 // pred_check_branch
      %49 = sbr.rel (0) target = $region29
    $region28: #{dqn_forward.1} parent=1 // pred_region
      _
    $region29: #{dqn_forward.1} parent=1 // pred_fallthru
      _
    // Predicated region
    $region30: #{dqn_forward.1} parent=1 // pred_check
      _
    $region31: #{dqn_forward.1} parent=1 // pred_check_branch
      %51 = sbr.rel (0) target = $region33
    $region32: #{dqn_forward.1} parent=1 // pred_region
      %53 = dma.done [#allocation3], 6144
    $region33: #{dqn_forward.1} parent=1 // pred_fallthru
      _
    // Predicated region
    $region34: #{dqn_forward.1} parent=1 // pred_check
      _
    $region35: #{dqn_forward.1} parent=1 // pred_check_branch
      %55 = sbr.rel (0) target = $region37
    $region36: #{dqn_forward.1} parent=1 // pred_region
      %57 = dma.done [#allocation5], 1024
    $region37: #{dqn_forward.1} parent=1 // pred_fallthru
      _
    %v58 = vld [vmem:[%s0] sm:$0xff]
    %v59 = vld [vmem:[%s0 + $0x8] sm:$0xf]
    %62 = vst [vmem:[#allocation1] ss:$4 sm:$0xff] %v58
    %s63 = scalar_lea.vmem [#allocation1], 32
    %64 = vst [vmem:[%s63] ss:$4 sm:$0xff] %v59
    %v65 = vld.sshfl [vmem:[#allocation1] sm:$0xff pattern:$0x73625140]
    %v66 = vld.sshfl [vmem:[#allocation1 + $0x8] sm:$0xff pattern:$0x73625140]
    %v67 = vld.sshfl [vmem:[#allocation1 + $0x10] sm:$0xff pattern:$0x73625140]
    %v68 = vld.sshfl [vmem:[#allocation1 + $0x18] sm:$0xff pattern:$0x73625140]
    %v69 = vld.sshfl [vmem:[#allocation1 + $0x20] sm:$0xff pattern:$0x73625140]
    %v70 = vld.sshfl [vmem:[#allocation1 + $0x28] sm:$0xff pattern:$0x73625140]
    %v77 = vpack.c.bf16 %v65, %v65
    %v78 = vpack.c.bf16 %v66, %v66
    %v79 = vpack.c.bf16 %v67, %v67
    %v80 = vpack.c.bf16 %v68, %v68
    %v81 = vpack.c.bf16 %v69, %v69
    %v82 = vpack.c.bf16 %v70, %v70
    %v83 = vld [vmem:[#allocation2] sm:$0xf]
    %v84 = vld [vmem:[#allocation2 + $0x4] sm:$0xf]
    %v85 = vld [vmem:[#allocation2 + $0x8] sm:$0xf]
    %v86 = vld [vmem:[#allocation2 + $0xc] sm:$0xf]
    %v87 = vld [vmem:[#allocation2 + $0x10] sm:$0xf]
    %v88 = vld [vmem:[#allocation2 + $0x14] sm:$0xf]
    %v89 = vld [vmem:[#allocation2 + $0x18] sm:$0xf]
    %v90 = vld [vmem:[#allocation2 + $0x1c] sm:$0xf]
    %v91 = vld [vmem:[#allocation2 + $0x20] sm:$0xf]
    %v92 = vld [vmem:[#allocation2 + $0x24] sm:$0xf]
    %v93 = vld [vmem:[#allocation2 + $0x28] sm:$0xf]
    %v94 = vld [vmem:[#allocation2 + $0x2c] sm:$0xf]
    %v95 = vld [vmem:[#allocation2 + $0x30] sm:$0xf]
    %v96 = vld [vmem:[#allocation2 + $0x34] sm:$0xf]
    %v97 = vld [vmem:[#allocation2 + $0x38] sm:$0xf]
    %v98 = vld [vmem:[#allocation2 + $0x3c] sm:$0xf]
    %v99 = vld [vmem:[#allocation2 + $0x40] sm:$0xf]
    %v100 = vld [vmem:[#allocation2 + $0x44] sm:$0xf]
    %v101 = vld [vmem:[#allocation2 + $0x48] sm:$0xf]
    %v102 = vld [vmem:[#allocation2 + $0x4c] sm:$0xf]
    %v103 = vld [vmem:[#allocation2 + $0x50] sm:$0xf]
    %v104 = vld [vmem:[#allocation2 + $0x54] sm:$0xf]
    %v105 = vld [vmem:[#allocation2 + $0x58] sm:$0xf]
    %v106 = vld [vmem:[#allocation2 + $0x5c] sm:$0xf]
    %v107 = vld [vmem:[#allocation2 + $0x60] sm:$0xf]
    %v108 = vld [vmem:[#allocation2 + $0x64] sm:$0xf]
    %v109 = vld [vmem:[#allocation2 + $0x68] sm:$0xf]
    %v110 = vld [vmem:[#allocation2 + $0x6c] sm:$0xf]
    %v111 = vld [vmem:[#allocation2 + $0x70] sm:$0xf]
    %v112 = vld [vmem:[#allocation2 + $0x74] sm:$0xf]
    %v113 = vld [vmem:[#allocation2 + $0x78] sm:$0xf]
    %v114 = vld [vmem:[#allocation2 + $0x7c] sm:$0xf]
    %v115 = vld [vmem:[#allocation2 + $0x80] sm:$0xf]
    %v116 = vld [vmem:[#allocation2 + $0x84] sm:$0xf]
    %v117 = vld [vmem:[#allocation2 + $0x88] sm:$0xf]
    %v118 = vld [vmem:[#allocation2 + $0x8c] sm:$0xf]
    %v119 = vld [vmem:[#allocation2 + $0x90] sm:$0xf]
    %v120 = vld [vmem:[#allocation2 + $0x94] sm:$0xf]
    %v121 = vld [vmem:[#allocation2 + $0x98] sm:$0xf]
    %v122 = vld [vmem:[#allocation2 + $0x9c] sm:$0xf]
    %v123 = vld [vmem:[#allocation2 + $0xa0] sm:$0xf]
    %v124 = vld [vmem:[#allocation2 + $0xa4] sm:$0xf]
    %v125 = vld [vmem:[#allocation2 + $0xa8] sm:$0xf]
    %v126 = vld [vmem:[#allocation2 + $0xac] sm:$0xf]
    %v127 = vld [vmem:[#allocation2 + $0xb0] sm:$0xf]
    %v128 = vld [vmem:[#allocation2 + $0xb4] sm:$0xf]
    %v129 = vld [vmem:[#allocation2 + $0xb8] sm:$0xf]
    %v130 = vld [vmem:[#allocation2 + $0xbc] sm:$0xf]
    %v131 = vld [vmem:[#allocation2 + $0xc0] sm:$0xf]
    %v132 = vld [vmem:[#allocation2 + $0xc4] sm:$0xf]
    %v133 = vld [vmem:[#allocation2 + $0xc8] sm:$0xf]
    %v134 = vld [vmem:[#allocation2 + $0xcc] sm:$0xf]
    %v135 = vld [vmem:[#allocation2 + $0xd0] sm:$0xf]
    %v136 = vld [vmem:[#allocation2 + $0xd4] sm:$0xf]
    %v137 = vld [vmem:[#allocation2 + $0xd8] sm:$0xf]
    %v138 = vld [vmem:[#allocation2 + $0xdc] sm:$0xf]
    %v139 = vld [vmem:[#allocation2 + $0xe0] sm:$0xf]
    %v140 = vld [vmem:[#allocation2 + $0xe4] sm:$0xf]
    %v141 = vld [vmem:[#allocation2 + $0xe8] sm:$0xf]
    %v142 = vld [vmem:[#allocation2 + $0xec] sm:$0xf]
    %v143 = vld [vmem:[#allocation2 + $0xf0] sm:$0xf]
    %v144 = vld [vmem:[#allocation2 + $0xf4] sm:$0xf]
    %v145 = vld [vmem:[#allocation2 + $0xf8] sm:$0xf]
    %v146 = vld [vmem:[#allocation2 + $0xfc] sm:$0xf]
    %v147 = vld [vmem:[#allocation2 + $0x100] sm:$0xf]
    %v148 = vld [vmem:[#allocation2 + $0x104] sm:$0xf]
    %v149 = vld [vmem:[#allocation2 + $0x108] sm:$0xf]
    %v150 = vld [vmem:[#allocation2 + $0x10c] sm:$0xf]
    %v151 = vld [vmem:[#allocation2 + $0x110] sm:$0xf]
    %v152 = vld [vmem:[#allocation2 + $0x114] sm:$0xf]
    %v153 = vld [vmem:[#allocation2 + $0x118] sm:$0xf]
    %v154 = vld [vmem:[#allocation2 + $0x11c] sm:$0xf]
    %v155 = vld [vmem:[#allocation2 + $0x120] sm:$0xf]
    %v156 = vld [vmem:[#allocation2 + $0x124] sm:$0xf]
    %v157 = vld [vmem:[#allocation2 + $0x128] sm:$0xf]
    %v158 = vld [vmem:[#allocation2 + $0x12c] sm:$0xf]
    %v159 = vld [vmem:[#allocation2 + $0x130] sm:$0xf]
    %v160 = vld [vmem:[#allocation2 + $0x134] sm:$0xf]
    %v161 = vld [vmem:[#allocation2 + $0x138] sm:$0xf]
    %v162 = vld [vmem:[#allocation2 + $0x13c] sm:$0xf]
    %v163 = vld [vmem:[#allocation2 + $0x140] sm:$0xf]
    %v164 = vld [vmem:[#allocation2 + $0x144] sm:$0xf]
    %v165 = vld [vmem:[#allocation2 + $0x148] sm:$0xf]
    %v166 = vld [vmem:[#allocation2 + $0x14c] sm:$0xf]
    %v167 = vld [vmem:[#allocation2 + $0x150] sm:$0xf]
    %v168 = vld [vmem:[#allocation2 + $0x154] sm:$0xf]
    %v169 = vld [vmem:[#allocation2 + $0x158] sm:$0xf]
    %v170 = vld [vmem:[#allocation2 + $0x15c] sm:$0xf]
    %v171 = vld [vmem:[#allocation2 + $0x160] sm:$0xf]
    %v172 = vld [vmem:[#allocation2 + $0x164] sm:$0xf]
    %v173 = vld [vmem:[#allocation2 + $0x168] sm:$0xf]
    %v174 = vld [vmem:[#allocation2 + $0x16c] sm:$0xf]
    %v175 = vld [vmem:[#allocation2 + $0x170] sm:$0xf]
    %v176 = vld [vmem:[#allocation2 + $0x174] sm:$0xf]
    %v177 = vld [vmem:[#allocation2 + $0x178] sm:$0xf]
    %v178 = vld [vmem:[#allocation2 + $0x17c] sm:$0xf]
    %v179 = vld [vmem:[%s2] sm:$0x1]
    %v181 = vperm.slane %v179, 0
    %v279 = vunpack.c.l.b16 %v83
    %v280 = vunpack.c.l.b16 %v84
    %v281 = vunpack.c.l.b16 %v85
    %v282 = vunpack.c.l.b16 %v86
    %v283 = vunpack.c.l.b16 %v87
    %v284 = vunpack.c.l.b16 %v88
    %v285 = vunpack.c.l.b16 %v89
    %v286 = vunpack.c.l.b16 %v90
    %v287 = vunpack.c.l.b16 %v91
    %v288 = vunpack.c.l.b16 %v92
    %v289 = vunpack.c.l.b16 %v93
    %v290 = vunpack.c.l.b16 %v94
    %v291 = vunpack.c.l.b16 %v95
    %v292 = vunpack.c.l.b16 %v96
    %v293 = vunpack.c.l.b16 %v97
    %v294 = vunpack.c.l.b16 %v98
    %v295 = vunpack.c.l.b16 %v99
    %v296 = vunpack.c.l.b16 %v100
    %v297 = vunpack.c.l.b16 %v101
    %v298 = vunpack.c.l.b16 %v102
    %v299 = vunpack.c.l.b16 %v103
    %v300 = vunpack.c.l.b16 %v104
    %v301 = vunpack.c.l.b16 %v105
    %v302 = vunpack.c.l.b16 %v106
    %v303 = vunpack.c.l.b16 %v107
    %v304 = vunpack.c.l.b16 %v108
    %v305 = vunpack.c.l.b16 %v109
    %v306 = vunpack.c.l.b16 %v110
    %v307 = vunpack.c.l.b16 %v111
    %v308 = vunpack.c.l.b16 %v112
    %v309 = vunpack.c.l.b16 %v113
    %v310 = vunpack.c.l.b16 %v114
    %v311 = vunpack.c.l.b16 %v115
    %v312 = vunpack.c.l.b16 %v116
    %v313 = vunpack.c.l.b16 %v117
    %v314 = vunpack.c.l.b16 %v118
    %v315 = vunpack.c.l.b16 %v119
    %v316 = vunpack.c.l.b16 %v120
    %v317 = vunpack.c.l.b16 %v121
    %v318 = vunpack.c.l.b16 %v122
    %v319 = vunpack.c.l.b16 %v123
    %v320 = vunpack.c.l.b16 %v124
    %v321 = vunpack.c.l.b16 %v125
    %v322 = vunpack.c.l.b16 %v126
    %v323 = vunpack.c.l.b16 %v127
    %v324 = vunpack.c.l.b16 %v128
    %v325 = vunpack.c.l.b16 %v129
    %v326 = vunpack.c.l.b16 %v130
    %v327 = vunpack.c.l.b16 %v131
    %v328 = vunpack.c.l.b16 %v132
    %v329 = vunpack.c.l.b16 %v133
    %v330 = vunpack.c.l.b16 %v134
    %v331 = vunpack.c.l.b16 %v135
    %v332 = vunpack.c.l.b16 %v136
    %v333 = vunpack.c.l.b16 %v137
    %v334 = vunpack.c.l.b16 %v138
    %v335 = vunpack.c.l.b16 %v139
    %v336 = vunpack.c.l.b16 %v140
    %v337 = vunpack.c.l.b16 %v141
    %v338 = vunpack.c.l.b16 %v142
    %v339 = vunpack.c.l.b16 %v143
    %v340 = vunpack.c.l.b16 %v144
    %v341 = vunpack.c.l.b16 %v145
    %v342 = vunpack.c.l.b16 %v146
    %v343 = vunpack.c.l.b16 %v147
    %v344 = vunpack.c.l.b16 %v148
    %v345 = vunpack.c.l.b16 %v149
    %v346 = vunpack.c.l.b16 %v150
    %v347 = vunpack.c.l.b16 %v151
    %v348 = vunpack.c.l.b16 %v152
    %v349 = vunpack.c.l.b16 %v153
    %v350 = vunpack.c.l.b16 %v154
    %v351 = vunpack.c.l.b16 %v155
    %v352 = vunpack.c.l.b16 %v156
    %v353 = vunpack.c.l.b16 %v157
    %v354 = vunpack.c.l.b16 %v158
    %v355 = vunpack.c.l.b16 %v159
    %v356 = vunpack.c.l.b16 %v160
    %v357 = vunpack.c.l.b16 %v161
    %v358 = vunpack.c.l.b16 %v162
    %v359 = vunpack.c.l.b16 %v163
    %v360 = vunpack.c.l.b16 %v164
    %v361 = vunpack.c.l.b16 %v165
    %v362 = vunpack.c.l.b16 %v166
    %v363 = vunpack.c.l.b16 %v167
    %v364 = vunpack.c.l.b16 %v168
    %v365 = vunpack.c.l.b16 %v169
    %v366 = vunpack.c.l.b16 %v170
    %v367 = vunpack.c.l.b16 %v171
    %v368 = vunpack.c.l.b16 %v172
    %v369 = vunpack.c.l.b16 %v173
    %v370 = vunpack.c.l.b16 %v174
    %v371 = vunpack.c.l.b16 %v175
    %v372 = vunpack.c.l.b16 %v176
    %v373 = vunpack.c.l.b16 %v177
    %v374 = vunpack.c.l.b16 %v178
    %v375 = vpack.c.b16 %v280, %v279
    %v376 = vpack.c.b16 %v282, %v281
    %v377 = vpack.c.b16 %v284, %v283
    %v378 = vpack.c.b16 %v286, %v285
    %v379 = vpack.c.b16 %v288, %v287
    %v380 = vpack.c.b16 %v290, %v289
    %v381 = vpack.c.b16 %v292, %v291
    %v382 = vpack.c.b16 %v294, %v293
    %v383 = vpack.c.b16 %v296, %v295
    %v384 = vpack.c.b16 %v298, %v297
    %v385 = vpack.c.b16 %v300, %v299
    %v386 = vpack.c.b16 %v302, %v301
    %v387 = vpack.c.b16 %v304, %v303
    %v388 = vpack.c.b16 %v306, %v305
    %v389 = vpack.c.b16 %v308, %v307
    %v390 = vpack.c.b16 %v310, %v309
    %v391 = vpack.c.b16 %v312, %v311
    %v392 = vpack.c.b16 %v314, %v313
    %v393 = vpack.c.b16 %v316, %v315
    %v394 = vpack.c.b16 %v318, %v317
    %v395 = vpack.c.b16 %v320, %v319
    %v396 = vpack.c.b16 %v322, %v321
    %v397 = vpack.c.b16 %v324, %v323
    %v398 = vpack.c.b16 %v326, %v325
    %v399 = vpack.c.b16 %v328, %v327
    %v400 = vpack.c.b16 %v330, %v329
    %v401 = vpack.c.b16 %v332, %v331
    %v402 = vpack.c.b16 %v334, %v333
    %v403 = vpack.c.b16 %v336, %v335
    %v404 = vpack.c.b16 %v338, %v337
    %v405 = vpack.c.b16 %v340, %v339
    %v406 = vpack.c.b16 %v342, %v341
    %v407 = vpack.c.b16 %v344, %v343
    %v408 = vpack.c.b16 %v346, %v345
    %v409 = vpack.c.b16 %v348, %v347
    %v410 = vpack.c.b16 %v350, %v349
    %v411 = vpack.c.b16 %v352, %v351
    %v412 = vpack.c.b16 %v354, %v353
    %v413 = vpack.c.b16 %v356, %v355
    %v414 = vpack.c.b16 %v358, %v357
    %v415 = vpack.c.b16 %v360, %v359
    %v416 = vpack.c.b16 %v362, %v361
    %v417 = vpack.c.b16 %v364, %v363
    %v418 = vpack.c.b16 %v366, %v365
    %v419 = vpack.c.b16 %v368, %v367
    %v420 = vpack.c.b16 %v370, %v369
    %v421 = vpack.c.b16 %v372, %v371
    %v422 = vpack.c.b16 %v374, %v373
    %471 = vmatpush.bf16.msra.mxu0 %v382
    %472 = vmatpush.bf16.msra.mxu0 %v381
    %473 = vmatpush.bf16.msra.mxu0 %v380
    %474 = vmatpush.bf16.msra.mxu0 %v379
    %475 = vmatpush.bf16.msra.mxu0 %v378
    %476 = vmatpush.bf16.msra.mxu0 %v377
    %477 = vmatpush.bf16.msra.mxu0 %v376
    %478 = vmatpush.bf16.msra.mxu0 %v375
    %479 = vmatmul.bf16.gmra.mxu0 %v77
    %v480 = vpop.f32.mrf.mxu0
    %v481 = vadd.f32 %v181, %v480
    %v482 = vpop.f32.mrf.mxu0
    %483 = vdwg.mxu0
    %484 = vmatpush.bf16.msra.mxu0 %v390
    %485 = vmatpush.bf16.msra.mxu0 %v389
    %486 = vmatpush.bf16.msra.mxu0 %v388
    %487 = vmatpush.bf16.msra.mxu0 %v387
    %488 = vmatpush.bf16.msra.mxu0 %v386
    %489 = vmatpush.bf16.msra.mxu0 %v385
    %490 = vmatpush.bf16.msra.mxu0 %v384
    %491 = vmatpush.bf16.msra.mxu0 %v383
    %492 = vmatmul.bf16.gmra.mxu0 %v78
    %v493 = vpop.f32.mrf.mxu0
    %v494 = vadd.f32 %v481, %v493
    %v495 = vpop.f32.mrf.mxu0
    %496 = vdwg.mxu0
    %497 = vmatpush.bf16.msra.mxu0 %v398
    %498 = vmatpush.bf16.msra.mxu0 %v397
    %499 = vmatpush.bf16.msra.mxu0 %v396
    %500 = vmatpush.bf16.msra.mxu0 %v395
    %501 = vmatpush.bf16.msra.mxu0 %v394
    %502 = vmatpush.bf16.msra.mxu0 %v393
    %503 = vmatpush.bf16.msra.mxu0 %v392
    %504 = vmatpush.bf16.msra.mxu0 %v391
    %505 = vmatmul.bf16.gmra.mxu0 %v79
    %v506 = vpop.f32.mrf.mxu0
    %v507 = vadd.f32 %v494, %v506
    %v508 = vpop.f32.mrf.mxu0
    %509 = vdwg.mxu0
    %510 = vmatpush.bf16.msra.mxu0 %v406
    %511 = vmatpush.bf16.msra.mxu0 %v405
    %512 = vmatpush.bf16.msra.mxu0 %v404
    %513 = vmatpush.bf16.msra.mxu0 %v403
    %514 = vmatpush.bf16.msra.mxu0 %v402
    %515 = vmatpush.bf16.msra.mxu0 %v401
    %516 = vmatpush.bf16.msra.mxu0 %v400
    %517 = vmatpush.bf16.msra.mxu0 %v399
    %518 = vmatmul.bf16.gmra.mxu0 %v80
    %v519 = vpop.f32.mrf.mxu0
    %v520 = vadd.f32 %v507, %v519
    %v521 = vpop.f32.mrf.mxu0
    %522 = vdwg.mxu0
    %523 = vmatpush.bf16.msra.mxu0 %v414
    %524 = vmatpush.bf16.msra.mxu0 %v413
    %525 = vmatpush.bf16.msra.mxu0 %v412
    %526 = vmatpush.bf16.msra.mxu0 %v411
    %527 = vmatpush.bf16.msra.mxu0 %v410
    %528 = vmatpush.bf16.msra.mxu0 %v409
    %529 = vmatpush.bf16.msra.mxu0 %v408
    %530 = vmatpush.bf16.msra.mxu0 %v407
    %531 = vmatmul.bf16.gmra.mxu0 %v81
    %v532 = vpop.f32.mrf.mxu0
    %v533 = vadd.f32 %v520, %v532
    %v534 = vpop.f32.mrf.mxu0
    %535 = vdwg.mxu0
    %536 = vmatpush.bf16.msra.mxu0 %v422
    %537 = vmatpush.bf16.msra.mxu0 %v421
    %538 = vmatpush.bf16.msra.mxu0 %v420
    %539 = vmatpush.bf16.msra.mxu0 %v419
    %540 = vmatpush.bf16.msra.mxu0 %v418
    %541 = vmatpush.bf16.msra.mxu0 %v417
    %542 = vmatpush.bf16.msra.mxu0 %v416
    %543 = vmatpush.bf16.msra.mxu0 %v415
    %544 = vmatmul.bf16.gmra.mxu0 %v82
    %v545 = vpop.f32.mrf.mxu0
    %v546 = vadd.f32 %v533, %v545
    %v547 = vpop.f32.mrf.mxu0
    %548 = vdwg.mxu0
    %v549 = vmax.f32 %v546, 0.0
    %v550 = vpack.c.bf16 %v549, %v549
    %v551 = vld [vmem:[%s3] sm:$0xf]
    %v552 = vld [vmem:[%s3 + $0x4] sm:$0xf]
    %v553 = vld [vmem:[%s3 + $0x8] sm:$0xf]
    %v554 = vld [vmem:[%s3 + $0xc] sm:$0xf]
    %v555 = vld [vmem:[%s3 + $0x10] sm:$0xf]
    %v556 = vld [vmem:[%s3 + $0x14] sm:$0xf]
    %v557 = vld [vmem:[%s3 + $0x18] sm:$0xf]
    %v558 = vld [vmem:[%s3 + $0x1c] sm:$0xf]
    %v559 = vld [vmem:[%s3 + $0x20] sm:$0xf]
    %v560 = vld [vmem:[%s3 + $0x24] sm:$0xf]
    %v561 = vld [vmem:[%s3 + $0x28] sm:$0xf]
    %v562 = vld [vmem:[%s3 + $0x2c] sm:$0xf]
    %v563 = vld [vmem:[%s3 + $0x30] sm:$0xf]
    %v564 = vld [vmem:[%s3 + $0x34] sm:$0xf]
    %v565 = vld [vmem:[%s3 + $0x38] sm:$0xf]
    %v566 = vld [vmem:[%s3 + $0x3c] sm:$0xf]
    %v567 = vld [vmem:[%s4] sm:$0x1]
    %v569 = vperm.slane %v567, 0
    %v587 = vunpack.c.l.b16 %v551
    %v588 = vunpack.c.l.b16 %v552
    %v589 = vunpack.c.l.b16 %v553
    %v590 = vunpack.c.l.b16 %v554
    %v591 = vunpack.c.l.b16 %v555
    %v592 = vunpack.c.l.b16 %v556
    %v593 = vunpack.c.l.b16 %v557
    %v594 = vunpack.c.l.b16 %v558
    %v595 = vunpack.c.l.b16 %v559
    %v596 = vunpack.c.l.b16 %v560
    %v597 = vunpack.c.l.b16 %v561
    %v598 = vunpack.c.l.b16 %v562
    %v599 = vunpack.c.l.b16 %v563
    %v600 = vunpack.c.l.b16 %v564
    %v601 = vunpack.c.l.b16 %v565
    %v602 = vunpack.c.l.b16 %v566
    %v603 = vpack.c.b16 %v588, %v587
    %v604 = vpack.c.b16 %v590, %v589
    %v605 = vpack.c.b16 %v592, %v591
    %v606 = vpack.c.b16 %v594, %v593
    %v607 = vpack.c.b16 %v596, %v595
    %v608 = vpack.c.b16 %v598, %v597
    %v609 = vpack.c.b16 %v600, %v599
    %v610 = vpack.c.b16 %v602, %v601
    %619 = vmatpush.bf16.msra.mxu0 %v610
    %620 = vmatpush.bf16.msra.mxu0 %v609
    %621 = vmatpush.bf16.msra.mxu0 %v608
    %622 = vmatpush.bf16.msra.mxu0 %v607
    %623 = vmatpush.bf16.msra.mxu0 %v606
    %624 = vmatpush.bf16.msra.mxu0 %v605
    %625 = vmatpush.bf16.msra.mxu0 %v604
    %626 = vmatpush.bf16.msra.mxu0 %v603
    %627 = vmatmul.bf16.gmra.mxu0 %v550
    %v628 = vpop.f32.mrf.mxu0
    %v629 = vadd.f32 %v569, %v628
    %v630 = vpop.f32.mrf.mxu0
    %631 = vdwg.mxu0
    %v632 = vmax.f32 %v629, 0.0
    %v633 = vpack.c.bf16 %v632, %v632
    %v634 = vld [vmem:[#allocation4] sm:$0xf]
    %v635 = vld [vmem:[#allocation4 + $0x4] sm:$0xf]
    %v636 = vld [vmem:[#allocation4 + $0x8] sm:$0xf]
    %v637 = vld [vmem:[#allocation4 + $0xc] sm:$0xf]
    %v638 = vld [vmem:[#allocation4 + $0x10] sm:$0xf]
    %v639 = vld [vmem:[#allocation4 + $0x14] sm:$0xf]
    %v640 = vld [vmem:[#allocation4 + $0x18] sm:$0xf]
    %v641 = vld [vmem:[#allocation4 + $0x1c] sm:$0xf]
    %v642 = vld [vmem:[#allocation4 + $0x20] sm:$0xf]
    %v643 = vld [vmem:[#allocation4 + $0x24] sm:$0xf]
    %v644 = vld [vmem:[#allocation4 + $0x28] sm:$0xf]
    %v645 = vld [vmem:[#allocation4 + $0x2c] sm:$0xf]
    %v646 = vld [vmem:[#allocation4 + $0x30] sm:$0xf]
    %v647 = vld [vmem:[#allocation4 + $0x34] sm:$0xf]
    %v648 = vld [vmem:[#allocation4 + $0x38] sm:$0xf]
    %v649 = vld [vmem:[#allocation4 + $0x3c] sm:$0xf]
    %v650 = vld [vmem:[%s6] sm:$0x1]
    %v652 = vperm.slane %v650, 0
    %v670 = vunpack.c.l.b16 %v634
    %v671 = vunpack.c.l.b16 %v635
    %v672 = vunpack.c.l.b16 %v636
    %v673 = vunpack.c.l.b16 %v637
    %v674 = vunpack.c.l.b16 %v638
    %v675 = vunpack.c.l.b16 %v639
    %v676 = vunpack.c.l.b16 %v640
    %v677 = vunpack.c.l.b16 %v641
    %v678 = vunpack.c.l.b16 %v642
    %v679 = vunpack.c.l.b16 %v643
    %v680 = vunpack.c.l.b16 %v644
    %v681 = vunpack.c.l.b16 %v645
    %v682 = vunpack.c.l.b16 %v646
    %v683 = vunpack.c.l.b16 %v647
    %v684 = vunpack.c.l.b16 %v648
    %v685 = vunpack.c.l.b16 %v649
    %v686 = vpack.c.b16 %v671, %v670
    %v687 = vpack.c.b16 %v673, %v672
    %v688 = vpack.c.b16 %v675, %v674
    %v689 = vpack.c.b16 %v677, %v676
    %v690 = vpack.c.b16 %v679, %v678
    %v691 = vpack.c.b16 %v681, %v680
    %v692 = vpack.c.b16 %v683, %v682
    %v693 = vpack.c.b16 %v685, %v684
    %702 = vmatpush.bf16.msra.mxu0 %v693
    %703 = vmatpush.bf16.msra.mxu0 %v692
    %704 = vmatpush.bf16.msra.mxu0 %v691
    %705 = vmatpush.bf16.msra.mxu0 %v690
    %706 = vmatpush.bf16.msra.mxu0 %v689
    %707 = vmatpush.bf16.msra.mxu0 %v688
    %708 = vmatpush.bf16.msra.mxu0 %v687
    %709 = vmatpush.bf16.msra.mxu0 %v686
    %710 = vmatmul.bf16.gmra.mxu0 %v633
    %v711 = vpop.f32.mrf.mxu0
    %v712 = vadd.f32 %v652, %v711
    %v713 = vpop.f32.mrf.mxu0
    %714 = vdwg.mxu0
    %v715 = vpack.c.bf16 %v712, %v712
    %716 = vst [vmem:[%s7] sm:$0x1] %v715
    // Predicated region
    $region38: #{dqn_forward.1} parent=1 // pred_check
      _
    $region39: #{dqn_forward.1} parent=1 // pred_check_branch
      %718 = sbr.rel (0) target = $region41
    $region40: #{dqn_forward.1} parent=1 // pred_region
      _
    $region41: #{dqn_forward.1} parent=1 // pred_fallthru
      _
    // Predicated region
    $region42: #{dqn_forward.1} parent=1 // pred_check
      _
    $region43: #{dqn_forward.1} parent=1 // pred_check_branch
      %720 = sbr.rel (0) target = $region45
    $region44: #{dqn_forward.1} parent=1 // pred_region
      _
    $region45: #{dqn_forward.1} parent=1 // pred_fallthru
      _
    %721 = vsyncpa [#allocation3], 1
    %722 = vsyncpa [#allocation5], 1

</llo_original>
